<compile_context>
chip_gen: v7x
topology: tpu7x:2x2x1
jax: 0.10.0
libtpu: 0.0.40
codegen_flags: <defaults>
</compile_context>

<pallas_src>
import jax
import jax.numpy as jnp
from jax.experimental import pallas as pl
from jax.experimental.pallas import tpu as pltpu

_MiB = 1024 * 1024


def _self_attn_pool_kernel(x_ref, w_ref, o_ref):
    # x_ref: (bb, T, D) VMEM; w_ref: (1, D) VMEM; o_ref: (bb, D) VMEM.
    x = x_ref[...]                                    # (bb, T, D)
    w = w_ref[...]                                    # (1, D), broadcasts over (bb, T, D)

    # scores[b, t] = sum_d x[b, t, d] * w[0, d]       -> (bb, T)  (lane reduce)
    # The nn.Linear bias is intentionally omitted: softmax is shift-invariant,
    # so adding the same scalar to every score cannot change the output.
    scores = jnp.sum(x * w, axis=-1)

    # Numerically stable softmax over T (last axis).
    m = jnp.max(scores, axis=-1, keepdims=True)       # (bb, 1)
    e = jnp.exp(scores - m)                           # (bb, T)
    denom = jnp.sum(e, axis=-1, keepdims=True)        # (bb, 1)
    p = e * pl.reciprocal(denom, approx=False)        # (bb, T)

    # Weighted sum over T: elementwise multiply (lane-broadcast of p) plus a
    # sublane-axis reduce, writing the (bb, D) output tile lane/sublane-dense
    # directly.  Avoids the per-batch M=1 MXU path and any relayout/squeeze.
    pooled = jnp.sum(x * p[:, :, None], axis=1)       # (bb, D), f32
    o_ref[...] = pooled.astype(o_ref.dtype)


def _vmem_capacity_bytes():
    """Physical VMEM per TensorCore; conservative 64 MiB fallback."""
    try:
        return int(pltpu.get_tpu_info().vmem_capacity_bytes)
    except Exception:
        return 64 * _MiB


def _pick_block_b(B, T, D, itemsize, tile_budget_bytes, min_grid_steps):
    """Largest batch block whose x tile fits the per-buffer VMEM budget."""
    if B <= 8:
        return B                          # block == full batch dim -> legal tile
    bytes_per_row = T * D * itemsize
    fit = max(1, tile_budget_bytes // bytes_per_row)
    bb = min(int(fit), B)
    if min_grid_steps > 1:
        bb = min(bb, -(-B // min_grid_steps))   # keep >= min_grid_steps blocks
    # Multiple of 8 so the (bb, D) output tile is sublane-dense; never shrink
    # below 8 (see TODO at top for the huge-T*D case).
    bb = max(8, (bb // 8) * 8)
    return bb


def self_attention_pooling(x, w, b=None, *, tile_budget_bytes=None):
    """SelfAttentionPooling forward.

    x: (B, T, D); w: (1, D) == nn.Linear(D, 1).weight; b: nn.Linear bias,
    accepted for interface parity but unused (softmax shift-invariance).
    Returns (B, D).
    """
    del b  # mathematically a no-op under softmax
    B, T, D = x.shape
    itemsize = x.dtype.itemsize

    vmem_cap = _vmem_capacity_bytes()
    small_vmem = vmem_cap <= 64 * _MiB            # v7x-like: 64 MiB/TC, 2 TCs
    if tile_budget_bytes is None:
        tile_budget_bytes = 8 * _MiB if small_vmem else 20 * _MiB
    # On a two-TensorCore part keep at least two grid steps so the "parallel"
    # batch axis can be split across cores.
    min_grid_steps = 2 if (small_vmem and B >= 16) else 1

    bb = _pick_block_b(B, T, D, itemsize, tile_budget_bytes, min_grid_steps)
    grid_len = pl.cdiv(B, bb)
    # Ragged last block (when bb does not divide B): OOB input rows have
    # unspecified contents, but every row's computation is independent and
    # OOB output rows are masked on store, so valid rows are unaffected.

    # Per-step VMEM footprint: double-buffered x tile, the x*w and x*p
    # elementwise temporaries, double-buffered output tile, weight row.
    footprint = (4 * bb * T * D + 2 * bb * D + D) * itemsize + 1 * _MiB
    vmem_limit = int(min(int(0.85 * vmem_cap), max(32 * _MiB, footprint)))

    cost = pl.CostEstimate(
        flops=4 * B * T * D,
        transcendentals=B * T,
        bytes_accessed=(B * T * D + B * D + D) * itemsize,
    )

    return pl.pallas_call(
        _self_attn_pool_kernel,
        out_shape=jax.ShapeDtypeStruct((B, D), x.dtype),
        grid_spec=pltpu.PrefetchScalarGridSpec(
            num_scalar_prefetch=0,
            grid=(grid_len,),
            in_specs=[
                pl.BlockSpec((bb, T, D), lambda i: (i, 0, 0)),
                pl.BlockSpec((1, D), lambda i: (0, 0)),
            ],
            out_specs=pl.BlockSpec((bb, D), lambda i: (i, 0)),
        ),
        compiler_params=pltpu.CompilerParams(
            dimension_semantics=("parallel",),
            vmem_limit_bytes=vmem_limit,
        ),
        cost_estimate=cost,
    )(x, w)


def _reference(x, w, b):
    # Pure-JAX replica of the PyTorch forward (W.weight == w (1, D), bias == b).
    scores = jnp.einsum("btd,d->bt", x, w[0]) + b[0]          # (B, T)
    att = jax.nn.softmax(scores, axis=-1)[..., None]          # (B, T, 1)
    return jnp.sum(x * att, axis=1)                           # (B, D)


if __name__ == "__main__":
    key = jax.random.PRNGKey(0)
    kx, kw, kb = jax.random.split(key, 3)

    # Primary case: lane-dense D (multiple of 128); B not divisible by the
    # batch block, exercising the ragged-last-block (masked store) path.
    B, T, D = 20, 16, 128
    x = jax.random.normal(kx, (B, T, D), dtype=jnp.float32)
    bound = 1.0 / (D ** 0.5)
    w = jax.random.uniform(kw, (1, D), dtype=jnp.float32,
                           minval=-bound, maxval=bound)
    b = jax.random.uniform(kb, (1,), dtype=jnp.float32,
                           minval=-bound, maxval=bound)

    out = jax.block_until_ready(self_attention_pooling(x, w, b))
    ref = _reference(x, w, b)
    assert out.shape == (B, D)
    err = float(jnp.max(jnp.abs(out - ref)))
    assert jnp.allclose(out, ref, atol=1e-4, rtol=1e-4), f"max abs err {err}"

    # Small / odd-shape case: B < 8, D not a multiple of 128 (full-dim blocks).
    B2, T2, D2 = 2, 8, 32
    kx2, kw2, kb2 = jax.random.split(jax.random.PRNGKey(1), 3)
    x2 = jax.random.normal(kx2, (B2, T2, D2), dtype=jnp.float32)
    bound2 = 1.0 / (D2 ** 0.5)
    w2 = jax.random.uniform(kw2, (1, D2), dtype=jnp.float32,
                            minval=-bound2, maxval=bound2)
    b2 = jax.random.uniform(kb2, (1,), dtype=jnp.float32,
                            minval=-bound2, maxval=bound2)
    out2 = jax.block_until_ready(self_attention_pooling(x2, w2, b2))
    ref2 = _reference(x2, w2, b2)
    assert out2.shape == (B2, D2)
    err2 = float(jnp.max(jnp.abs(out2 - ref2)))
    assert jnp.allclose(out2, ref2, atol=1e-4, rtol=1e-4), f"max abs err {err2}"

    print("KERNEL_OK")
</pallas_src>

<mosaic_0001>
module attributes {stable_mosaic.version = 11 : i64} {
  func.func @_self_attn_pool_kernel(%arg0: i32, %arg1: memref<8x16x128xf32, #tpu.memory_space<vmem>>, %arg2: memref<1x128xf32, #tpu.memory_space<vmem>>, %arg3: memref<8x128xf32, #tpu.memory_space<vmem>>) attributes {dimension_semantics = [#tpu.dimension_semantics<parallel>], iteration_bounds = array<i64: 3>, scalar_prefetch = 0 : i64, scratch_operands = 0 : i64, tpu.core_type = #tpu.core_type<tc>, window_params = [{transform_indices = @transform_0, window_bounds = array<i64: 8, 16, 128>}, {pipeline_mode = #tpu.pipeline_mode<synchronous>, transform_indices = @transform_1, window_bounds = array<i64: 1, 128>}, {transform_indices = @transform_2, window_bounds = array<i64: 8, 128>}]} {
    %c0 = arith.constant 0 : index
    %c0_0 = arith.constant 0 : index
    %c0_1 = arith.constant 0 : index
    %0 = vector.load %arg1[%c0, %c0_0, %c0_1] : memref<8x16x128xf32, #tpu.memory_space<vmem>>, vector<8x16x128xf32>
    %c0_2 = arith.constant 0 : index
    %c0_3 = arith.constant 0 : index
    %1 = vector.load %arg2[%c0_2, %c0_3] : memref<1x128xf32, #tpu.memory_space<vmem>>, vector<1x128xf32>
    %2 = vector.shape_cast %1 : vector<1x128xf32> to vector<1x1x128xf32>
    %3 = vector.broadcast %2 : vector<1x1x128xf32> to vector<8x16x128xf32>
    %4 = arith.mulf %0, %3 : vector<8x16x128xf32>
    %cst = arith.constant dense<0.000000e+00> : vector<8x16xf32>
    %5 = vector.multi_reduction <add>, %4, %cst [2] : vector<8x16x128xf32> to vector<8x16xf32>
    %cst_4 = arith.constant dense<0xFF800000> : vector<8xf32>
    %6 = vector.multi_reduction <maximumf>, %5, %cst_4 [1] : vector<8x16xf32> to vector<8xf32>
    %7 = vector.shape_cast %6 : vector<8xf32> to vector<8x1xf32>
    %8 = vector.broadcast %7 : vector<8x1xf32> to vector<8x16xf32>
    %9 = arith.subf %5, %8 : vector<8x16xf32>
    %10 = math.exp %9 : vector<8x16xf32>
    %cst_5 = arith.constant dense<0.000000e+00> : vector<8xf32>
    %11 = vector.multi_reduction <add>, %10, %cst_5 [1] : vector<8x16xf32> to vector<8xf32>
    %12 = vector.shape_cast %11 : vector<8xf32> to vector<8x1xf32>
    %13 = tpu.reciprocal %12 : vector<8x1xf32> -> vector<8x1xf32>
    %14 = vector.broadcast %13 : vector<8x1xf32> to vector<8x16xf32>
    %15 = arith.mulf %10, %14 : vector<8x16xf32>
    %16 = vector.shape_cast %15 : vector<8x16xf32> to vector<8x16x1xf32>
    %17 = vector.broadcast %16 : vector<8x16x1xf32> to vector<8x16x128xf32>
    %18 = arith.mulf %0, %17 : vector<8x16x128xf32>
    %cst_6 = arith.constant dense<0.000000e+00> : vector<8x128xf32>
    %19 = vector.multi_reduction <add>, %18, %cst_6 [1] : vector<8x16x128xf32> to vector<8x128xf32>
    %c0_7 = arith.constant 0 : index
    %c0_8 = arith.constant 0 : index
    %20 = vector.load %arg3[%c0_7, %c0_8] : memref<8x128xf32, #tpu.memory_space<vmem>>, vector<8x128xf32>
    tpu.vector_store %arg3[%c0_7, %c0_8], %19 {strides = array<i32>} : memref<8x128xf32, #tpu.memory_space<vmem>>, vector<8x128xf32>,
    return
  }
  func.func @transform_0(%arg0: i32) -> (i32, i32, i32) {
    %c0_i32 = arith.constant 0 : i32
    %c0_i32_0 = arith.constant 0 : i32
    %c0_i32_1 = arith.constant 0 : i32
    return %arg0, %c0_i32, %c0_i32_0 : i32, i32, i32
  }
  func.func @transform_1(%arg0: i32) -> (i32, i32) {
    %c0_i32 = arith.constant 0 : i32
    %c0_i32_0 = arith.constant 0 : i32
    %c0_i32_1 = arith.constant 0 : i32
    return %c0_i32, %c0_i32_0 : i32, i32
  }
  func.func @transform_2(%arg0: i32) -> (i32, i32) {
    %c0_i32 = arith.constant 0 : i32
    %c0_i32_0 = arith.constant 0 : i32
    return %arg0, %c0_i32 : i32, i32
  }
}

</mosaic_0001>

<llo_original>
// kernel: tpu_custom_call.1
$region0: #{tpu_custom_call.1}
  #allocation0 [shape = 'u32[]', space=smem, size = 0x4, offset = 0x4, fixed_abs, tag = 'smem constant byte address 0x4 - core index']
  #allocation1 [shape = 'u32[144,128]{1,0:T(1,128)}', space=vmem, size = 0x12000, scoped, tag = 'internal scratch']
  %s0 = inlined_call_operand.hbm [shape: f32[20,16,128], index: 0, kind: input, shape index: {}]
  %s1 = inlined_call_operand.vmem [shape: f32[1,128], index: 1, kind: input, shape index: {}]
  %s2 = inlined_call_operand.hbm [shape: f32[20,128], index: 2, kind: output, shape index: {}]
  %s3 = sld [smem:[#allocation0]]
  $region45: #{tpu_custom_call.1} parent=0
    _
  %s5 = ssub.s32 1, %s3
  %s6 = scalar_select 0, %s5, %s3
  $region1: #{tpu_custom_call.1} parent=0
    #allocation2 [shape = 'u8[131072]{0}', space=vmem, size = 0x20000, scoped, tag = 'input window, operand 0']
    #allocation3 [shape = 's32[2]{0}', space=sflag, size = 0x8, scoped, tag = 'scoped memory for tpu_custom_call.1']
    #allocation4 [shape = 's32[2]{0}', space=sflag, size = 0x8, scoped, tag = 'scoped memory for tpu_custom_call.1']
    #allocation5 [shape = 'u8[8192]{0}', space=vmem, size = 0x2000, scoped, tag = 'output window, operand 0']
    %7 = vsyncpa [#allocation3], 0
    %s8 = scalar_lea.sflag [#allocation3], 1
    %9 = vsyncpa %s8, 0
    %10 = vsyncpa [#allocation4], 0
    %s11 = scalar_lea.sflag [#allocation4], 1
    %12 = vsyncpa %s11, 0
    loop: start=0, step=1, limit=5
    $region2: #{tpu_custom_call.1} parent=1 // loop_pre_header
      _
    $region3: #{tpu_custom_call.1} parent=1 // loop_header
      %s14 = sphi 0, %s18
      %p15 = scmp.ge.s32.totalorder %s14, 5
      %s24 = sphi 0, %s26
      %s27 = sphi 0, %s24
      %s28 = sphi 0, %s27
      %s44 = sphi 0, %s28
      %s48 = sphi 0, %s48
      %s50 = sphi 0, %s48
      %s51 = sphi 0, %s50
      %s65 = sphi 0, %s51
      %s71 = sphi 0, %s73
      %s74 = sphi 0, %s71
      %s75 = sphi 0, %s74
      %s91 = sphi 0, %s75
    $region4: #{tpu_custom_call.1} parent=1 // loop_header_branch
      %17 = sbr.rel (%p15) target = $region8
    $region5: #{tpu_custom_call.1} parent=1 // loop_body
      %s19 = ssub.s32 %s14, 1
      %s20 = ssub.s32 %s14, 2
      %s21 = sadd.s32 %s14, 1
      %s22 = ssub.s32 %s14, %s21
      %p23 = scmp.eq.s32.totalorder %s22, 0
      %s25 = sadd.s32 %s24, 1
      %s26 = scalar_select %p23, %s24, %s25
      %p29 = pneg %p23
      %p30 = scmp.eq.s32.totalorder %s14, 2
      %p31 = por %p29, %p30
      %p32 = scmp.ne.s32.totalorder %s24, %s27
      %p33 = scmp.eq.s32.totalorder %s14, 0
      %p34 = por %p32, %p33
      %p35 = scmp.ne.s32.totalorder %s24, %s27
      %p36 = scmp.eq.s32.totalorder %s19, 2
      %p37 = por %p35, %p36
      %p38 = scmp.ne.s32.totalorder %s27, %s28
      %p39 = scmp.eq.s32.totalorder %s19, 0
      %p40 = por %p38, %p39
      %p41 = scmp.ne.s32.totalorder %s27, %s28
      %p42 = scmp.eq.s32.totalorder %s20, 2
      %p43 = por %p41, %p42
      %p45 = scmp.ne.s32.totalorder %s28, %s44
      %p46 = scmp.eq.s32.totalorder %s20, 0
      %p47 = por %p45, %p46
      %s49 = sadd.s32 %s48, 1
      %p52 = scmp.eq.s32.totalorder %s14, 2
      %p53 = scmp.ne.s32.totalorder %s48, %s50
      %p54 = scmp.eq.s32.totalorder %s14, 0
      %p55 = por %p53, %p54
      %p56 = scmp.ne.s32.totalorder %s48, %s50
      %p57 = scmp.eq.s32.totalorder %s19, 2
      %p58 = por %p56, %p57
      %p59 = scmp.ne.s32.totalorder %s50, %s51
      %p60 = scmp.eq.s32.totalorder %s19, 0
      %p61 = por %p59, %p60
      %p62 = scmp.ne.s32.totalorder %s50, %s51
      %p63 = scmp.eq.s32.totalorder %s20, 2
      %p64 = por %p62, %p63
      %p66 = scmp.ne.s32.totalorder %s51, %s65
      %p67 = scmp.eq.s32.totalorder %s20, 0
      %p68 = por %p66, %p67
      %s69 = ssub.s32 %s14, %s21
      %p70 = scmp.eq.s32.totalorder %s69, 0
      %s72 = sadd.s32 %s71, 1
      %s73 = scalar_select %p70, %s71, %s72
      %p76 = pneg %p70
      %p77 = scmp.eq.s32.totalorder %s14, 2
      %p78 = por %p76, %p77
      %p79 = scmp.ne.s32.totalorder %s71, %s74
      %p80 = scmp.eq.s32.totalorder %s14, 0
      %p81 = por %p79, %p80
      %p82 = scmp.ne.s32.totalorder %s71, %s74
      %p83 = scmp.eq.s32.totalorder %s19, 2
      %p84 = por %p82, %p83
      %p85 = scmp.ne.s32.totalorder %s74, %s75
      %p86 = scmp.eq.s32.totalorder %s19, 0
      %p87 = por %p85, %p86
      %p88 = scmp.ne.s32.totalorder %s74, %s75
      %p89 = scmp.eq.s32.totalorder %s20, 2
      %p90 = por %p88, %p89
      %p92 = scmp.ne.s32.totalorder %s75, %s91
      %p93 = scmp.eq.s32.totalorder %s20, 0
      %p94 = por %p92, %p93
      %p95 = scmp.le.s32.totalorder 1, %s14
      %p96 = scmp.lt.s32.totalorder %s14, 4
      %p97 = pnand %p95, %p96
      %p98 = pneg %p97
      // Predicated region
      $region9: #{tpu_custom_call.1} parent=5 // pred_check
        _
      $region10: #{tpu_custom_call.1} parent=5 // pred_check_branch
        %100 = sbr.rel (%p97) target = $region12
      $region11: #{tpu_custom_call.1} parent=5 // pred_region
        %s101 = ssub.s32 %s14, 1
        // Predicated region
        $region13: #{tpu_custom_call.1} parent=11 // pred_check
          %p102 = pneg %p61
        $region14: #{tpu_custom_call.1} parent=11 // pred_check_branch
          %104 = sbr.rel (%p102) target = $region16
        $region15: #{tpu_custom_call.1} parent=11 // pred_region
          _
        $region16: #{tpu_custom_call.1} parent=11 // pred_fallthru
          _
      $region12: #{tpu_custom_call.1} parent=5 // pred_fallthru
        _
      %p105 = scmp.lt.s32.totalorder %s14, 3
      // Predicated region
      $region17: #{tpu_custom_call.1} parent=5 // pred_check
        %p106 = pneg %p105
      $region18: #{tpu_custom_call.1} parent=5 // pred_check_branch
        %108 = sbr.rel (%p106) target = $region20
      $region19: #{tpu_custom_call.1} parent=5 // pred_region
        // Predicated region
        $region21: #{tpu_custom_call.1} parent=19 // pred_check
          %p109 = pneg %p34
        $region22: #{tpu_custom_call.1} parent=19 // pred_check_branch
          %111 = sbr.rel (%p109) target = $region24
        $region23: #{tpu_custom_call.1} parent=19 // pred_region
          %s112 = sand.u32 %s24, 1
          %s113 = scalar_lea.sflag [#allocation3], %s112
          %s114 = sand.u32 %s24, 1
          %s115 = smul.addr %s114, 128
          %s116 = scalar_lea.vmem [#allocation2], %s115
          %s117 = smul.u32 8, %s14
          %s118 = ssub.s32 20, %s117
          %p119 = scmp.lt.s32.totalorder %s118, 8
          %s120 = scalar_select %p119, %s118, 8
          %s121 = smul.u32 128, %s120
          %s122 = smul.u32 %s121, 2
          %s124 = ssub.s32 2048, %s122
          %125 = vsyncadd %s113, %s124
          %p126 = scmp.ne.s32.totalorder 0, %s122
          %s127 = smul.addr %s117, 2
          %s128 = smul.addr %s127, 128
          %s129 = scalar_lea.hbm %s0, %s128
          %s130 = smul.u32 %s120, 2
          %s131 = smul.u32 8, %s130
          %s132 = sshll.u32 %s116, 4
          %s133 = int_to_ptr.vmem [resolvable:$true] %s132
          %s134 = sshll.u32 %s131, 4
          %138 = dma.hbm_to_vmem [thread:$0]  (%p126), %s129, %s134, %s133, %s113, 128, 128, 8
        $region24: #{tpu_custom_call.1} parent=19 // pred_fallthru
          _
      $region20: #{tpu_custom_call.1} parent=5 // pred_fallthru
        _
      %p139 = scmp.le.s32.totalorder 1, %s14
      %p140 = scmp.lt.s32.totalorder %s14, 4
      %p141 = pnand %p139, %p140
      %p142 = pneg %p141
      // Predicated region
      $region25: #{tpu_custom_call.1} parent=5 // pred_check
        _
      $region26: #{tpu_custom_call.1} parent=5 // pred_check_branch
        %144 = sbr.rel (%p141) target = $region28
      $region27: #{tpu_custom_call.1} parent=5 // pred_region
        %s145 = ssub.s32 %s14, 1
        %s146 = sand.u32 %s27, 1
        %s147 = scalar_lea.sflag [#allocation3], %s146
        %s148 = sand.u32 %s27, 1
        %s149 = smul.addr %s148, 128
        %s150 = scalar_lea.vmem [#allocation2], %s149
        // Predicated region
        $region29: #{tpu_custom_call.1} parent=27 // pred_check
          %p151 = pneg %p40
        $region30: #{tpu_custom_call.1} parent=27 // pred_check_branch
          %153 = sbr.rel (%p151) target = $region32
        $region31: #{tpu_custom_call.1} parent=27 // pred_region
          %154 = dma.done %s147, 2048
        $region32: #{tpu_custom_call.1} parent=27 // pred_fallthru
          _
        %s155 = sand.u32 %s27, 1
        %s156 = scalar_lea.sflag [#allocation3], %s155
        %s157 = sand.u32 %s27, 1
        %s158 = smul.addr %s157, 128
        %s159 = scalar_lea.vmem [#allocation2], %s158
        %p160 = pneg %p40
        %p161 = pneg %p37
        %p162 = pneg %p61
        %p163 = pneg %p58
        %p164 = pneg %p87
        %p165 = pneg %p84
        %s166 = sand.u32 %s74, 1
        %s167 = scalar_lea.sflag [#allocation4], %s166
        %s168 = sand.u32 %s74, 1
        %s169 = smul.addr %s168, 8
        %s170 = scalar_lea.vmem [#allocation5], %s169
        %s171 = smul.u32 8, %s19
        %s172 = ssub.s32 20, %s171
        %p173 = scmp.lt.s32.totalorder %s172, 8
        %s174 = scalar_select %p173, %s172, 8
        %s175 = smul.u32 128, %s174
        %s176 = smul.u32 %s175, 2
        %v177 = vld [vmem:[%s150] sm:$0xff]
        %v178 = vld [vmem:[%s150 + $0x8] sm:$0xff]
        %v179 = vld [vmem:[%s150 + $0x10] sm:$0xff]
        %v180 = vld [vmem:[%s150 + $0x18] sm:$0xff]
        %v181 = vld [vmem:[%s150 + $0x20] sm:$0xff]
        %v182 = vld [vmem:[%s150 + $0x28] sm:$0xff]
        %v183 = vld [vmem:[%s150 + $0x30] sm:$0xff]
        %v184 = vld [vmem:[%s150 + $0x38] sm:$0xff]
        %v185 = vld [vmem:[%s150 + $0x40] sm:$0xff]
        %v186 = vld [vmem:[%s150 + $0x48] sm:$0xff]
        %v187 = vld [vmem:[%s150 + $0x50] sm:$0xff]
        %v188 = vld [vmem:[%s150 + $0x58] sm:$0xff]
        %v189 = vld [vmem:[%s150 + $0x60] sm:$0xff]
        %v190 = vld [vmem:[%s150 + $0x68] sm:$0xff]
        %v191 = vld [vmem:[%s150 + $0x70] sm:$0xff]
        %v192 = vld [vmem:[%s150 + $0x78] sm:$0xff]
        %v193 = vld [vmem:[%s1] sm:$0x1]
        %v195 = vlaneseq
        %v196 = vshrl.u32 %v195, 7
        %v197 = vsub.s32 0, %v196
        %v198 = vrot.slane %v193, %v197
        %v200 = vmul.f32 %v177, %v198
        %v201 = vmul.f32 %v178, %v198
        %v202 = vmul.f32 %v179, %v198
        %v203 = vmul.f32 %v180, %v198
        %v204 = vmul.f32 %v181, %v198
        %v205 = vmul.f32 %v182, %v198
        %v206 = vmul.f32 %v183, %v198
        %v207 = vmul.f32 %v184, %v198
        %v208 = vmul.f32 %v185, %v198
        %v209 = vmul.f32 %v186, %v198
        %v210 = vmul.f32 %v187, %v198
        %v211 = vmul.f32 %v188, %v198
        %v212 = vmul.f32 %v189, %v198
        %v213 = vmul.f32 %v190, %v198
        %v214 = vmul.f32 %v191, %v198
        %v215 = vmul.f32 %v192, %v198
        %216 = vadd.xlane.f32.xlu0 %v200
        %v217 = vpop.xlane.xlu0 %216
        %218 = vadd.xlane.f32.xlu0 %v201
        %v219 = vpop.xlane.xlu0 %218
        %220 = vadd.xlane.f32.xlu0 %v202
        %v221 = vpop.xlane.xlu0 %220
        %222 = vadd.xlane.f32.xlu0 %v203
        %v223 = vpop.xlane.xlu0 %222
        %224 = vadd.xlane.f32.xlu0 %v204
        %v225 = vpop.xlane.xlu0 %224
        %226 = vadd.xlane.f32.xlu0 %v205
        %v227 = vpop.xlane.xlu0 %226
        %228 = vadd.xlane.f32.xlu0 %v206
        %v229 = vpop.xlane.xlu0 %228
        %230 = vadd.xlane.f32.xlu0 %v207
        %v231 = vpop.xlane.xlu0 %230
        %232 = vadd.xlane.f32.xlu0 %v208
        %v233 = vpop.xlane.xlu0 %232
        %234 = vadd.xlane.f32.xlu0 %v209
        %v235 = vpop.xlane.xlu0 %234
        %236 = vadd.xlane.f32.xlu0 %v210
        %v237 = vpop.xlane.xlu0 %236
        %238 = vadd.xlane.f32.xlu0 %v211
        %v239 = vpop.xlane.xlu0 %238
        %240 = vadd.xlane.f32.xlu0 %v212
        %v241 = vpop.xlane.xlu0 %240
        %242 = vadd.xlane.f32.xlu0 %v213
        %v243 = vpop.xlane.xlu0 %242
        %244 = vadd.xlane.f32.xlu0 %v214
        %v245 = vpop.xlane.xlu0 %244
        %246 = vadd.xlane.f32.xlu0 %v215
        %v247 = vpop.xlane.xlu0 %246
        %v264 = vlaneseq
        %v265 = vand.u32 %v264, 127
        %v266 = vlaneseq
        %v267 = vshrl.u32 %v266, 7
        %v268 = vsub.s32 %v265, %v267
        %v269 = vrot.slane %v217, %v268
        %v270 = vadd.s32 %v265, 4294967288
        %v271 = vlaneseq
        %v272 = vshrl.u32 %v271, 7
        %v273 = vsub.s32 %v270, %v272
        %v274 = vrot.slane %v219, %v273
        %vm275 = vcmask 130112
        %v276 = vsel %vm275, %v274, %v269
        %v277 = vlaneseq
        %v278 = vshrl.u32 %v277, 7
        %v279 = vsub.s32 %v265, %v278
        %v280 = vrot.slane %v221, %v279
        %v281 = vlaneseq
        %v282 = vshrl.u32 %v281, 7
        %v283 = vsub.s32 %v270, %v282
        %v284 = vrot.slane %v223, %v283
        %v285 = vsel %vm275, %v284, %v280
        %v286 = vlaneseq
        %v287 = vshrl.u32 %v286, 7
        %v288 = vsub.s32 %v265, %v287
        %v289 = vrot.slane %v225, %v288
        %v290 = vlaneseq
        %v291 = vshrl.u32 %v290, 7
        %v292 = vsub.s32 %v270, %v291
        %v293 = vrot.slane %v227, %v292
        %v294 = vsel %vm275, %v293, %v289
        %v295 = vlaneseq
        %v296 = vshrl.u32 %v295, 7
        %v297 = vsub.s32 %v265, %v296
        %v298 = vrot.slane %v229, %v297
        %v299 = vlaneseq
        %v300 = vshrl.u32 %v299, 7
        %v301 = vsub.s32 %v270, %v300
        %v302 = vrot.slane %v231, %v301
        %v303 = vsel %vm275, %v302, %v298
        %v304 = vlaneseq
        %v305 = vshrl.u32 %v304, 7
        %v306 = vsub.s32 %v265, %v305
        %v307 = vrot.slane %v233, %v306
        %v308 = vlaneseq
        %v309 = vshrl.u32 %v308, 7
        %v310 = vsub.s32 %v270, %v309
        %v311 = vrot.slane %v235, %v310
        %v312 = vsel %vm275, %v311, %v307
        %v313 = vlaneseq
        %v314 = vshrl.u32 %v313, 7
        %v315 = vsub.s32 %v265, %v314
        %v316 = vrot.slane %v237, %v315
        %v317 = vlaneseq
        %v318 = vshrl.u32 %v317, 7
        %v319 = vsub.s32 %v270, %v318
        %v320 = vrot.slane %v239, %v319
        %v321 = vsel %vm275, %v320, %v316
        %v322 = vlaneseq
        %v323 = vshrl.u32 %v322, 7
        %v324 = vsub.s32 %v265, %v323
        %v325 = vrot.slane %v241, %v324
        %v326 = vlaneseq
        %v327 = vshrl.u32 %v326, 7
        %v328 = vsub.s32 %v270, %v327
        %v329 = vrot.slane %v243, %v328
        %v330 = vsel %vm275, %v329, %v325
        %v331 = vlaneseq
        %v332 = vshrl.u32 %v331, 7
        %v333 = vsub.s32 %v265, %v332
        %v334 = vrot.slane %v245, %v333
        %v335 = vlaneseq
        %v336 = vshrl.u32 %v335, 7
        %v337 = vsub.s32 %v270, %v336
        %v338 = vrot.slane %v247, %v337
        %v339 = vsel %vm275, %v338, %v334
        %vm340 = vcmask 1041409
        %v341 = vsel %vm340, %v285, %v276
        %vm342 = vcmask 1042434
        %v343 = vsel %vm342, %v294, %v341
        %vm344 = vcmask 1043459
        %v345 = vsel %vm344, %v303, %v343
        %vm346 = vcmask 1044484
        %v347 = vsel %vm346, %v312, %v345
        %vm348 = vcmask 1045509
        %v349 = vsel %vm348, %v321, %v347
        %vm350 = vcmask 1046534
        %v351 = vsel %vm350, %v330, %v349
        %vm352 = vcmask 1047559
        %v353 = vsel %vm352, %v339, %v351
        %vm355 = vcmask 130048
        %v356 = vsel %vm355, %v353, -inf
        %357 = vmax.xlane.f32.xlu0 %v356
        %v358 = vpop.xlane.xlu0 %357
        %v360 = vlaneseq
        %v361 = vshrl.u32 %v360, 7
        %v362 = vsub.s32 0, %v361
        %v363 = vrot.slane %v358, %v362
        %v364 = vlaneseq
        %v365 = vshrl.u32 %v364, 7
        %v366 = vsub.s32 1, %v365
        %v367 = vrot.slane %v358, %v366
        %v368 = vlaneseq
        %v369 = vshrl.u32 %v368, 7
        %v370 = vsub.s32 2, %v369
        %v371 = vrot.slane %v358, %v370
        %v372 = vlaneseq
        %v373 = vshrl.u32 %v372, 7
        %v374 = vsub.s32 3, %v373
        %v375 = vrot.slane %v358, %v374
        %v376 = vlaneseq
        %v377 = vshrl.u32 %v376, 7
        %v378 = vsub.s32 4, %v377
        %v379 = vrot.slane %v358, %v378
        %v380 = vlaneseq
        %v381 = vshrl.u32 %v380, 7
        %v382 = vsub.s32 5, %v381
        %v383 = vrot.slane %v358, %v382
        %v384 = vlaneseq
        %v385 = vshrl.u32 %v384, 7
        %v386 = vsub.s32 6, %v385
        %v387 = vrot.slane %v358, %v386
        %v388 = vlaneseq
        %v389 = vshrl.u32 %v388, 7
        %v390 = vsub.s32 7, %v389
        %v391 = vrot.slane %v358, %v390
        %v400 = vsub.f32 %v217, %v363
        %v401 = vsub.f32 %v219, %v363
        %v402 = vsub.f32 %v221, %v367
        %v403 = vsub.f32 %v223, %v367
        %v404 = vsub.f32 %v225, %v371
        %v405 = vsub.f32 %v227, %v371
        %v406 = vsub.f32 %v229, %v375
        %v407 = vsub.f32 %v231, %v375
        %v408 = vsub.f32 %v233, %v379
        %v409 = vsub.f32 %v235, %v379
        %v410 = vsub.f32 %v237, %v383
        %v411 = vsub.f32 %v239, %v383
        %v412 = vsub.f32 %v241, %v387
        %v413 = vsub.f32 %v243, %v387
        %v414 = vsub.f32 %v245, %v391
        %v415 = vsub.f32 %v247, %v391
        %v416 = vmul.f32 %v400, 1.442695
        %v417 = vpow.pop %v416
        %v418 = vmul.f32 %v401, 1.442695
        %v419 = vpow.pop %v418
        %v420 = vmul.f32 %v402, 1.442695
        %v421 = vpow.pop %v420
        %v422 = vmul.f32 %v403, 1.442695
        %v423 = vpow.pop %v422
        %v424 = vmul.f32 %v404, 1.442695
        %v425 = vpow.pop %v424
        %v426 = vmul.f32 %v405, 1.442695
        %v427 = vpow.pop %v426
        %v428 = vmul.f32 %v406, 1.442695
        %v429 = vpow.pop %v428
        %v430 = vmul.f32 %v407, 1.442695
        %v431 = vpow.pop %v430
        %v432 = vmul.f32 %v408, 1.442695
        %v433 = vpow.pop %v432
        %v434 = vmul.f32 %v409, 1.442695
        %v435 = vpow.pop %v434
        %v436 = vmul.f32 %v410, 1.442695
        %v437 = vpow.pop %v436
        %v438 = vmul.f32 %v411, 1.442695
        %v439 = vpow.pop %v438
        %v440 = vmul.f32 %v412, 1.442695
        %v441 = vpow.pop %v440
        %v442 = vmul.f32 %v413, 1.442695
        %v443 = vpow.pop %v442
        %v444 = vmul.f32 %v414, 1.442695
        %v445 = vpow.pop %v444
        %v446 = vmul.f32 %v415, 1.442695
        %v447 = vpow.pop %v446
        %464 = vset.pattern.permute.xlu0 0
        %465 = vperm.xlu0 %464, %v417
        %v466 = vpop.permute.xlu0 %465
        %467 = vset.pattern.permute.xlu0 0
        %468 = vperm.xlu0 %467, %v419
        %v469 = vpop.permute.xlu0 %468
        %470 = vset.pattern.permute.xlu0 0
        %471 = vperm.xlu0 %470, %v421
        %v472 = vpop.permute.xlu0 %471
        %473 = vset.pattern.permute.xlu0 0
        %474 = vperm.xlu0 %473, %v423
        %v475 = vpop.permute.xlu0 %474
        %476 = vset.pattern.permute.xlu0 0
        %477 = vperm.xlu0 %476, %v425
        %v478 = vpop.permute.xlu0 %477
        %479 = vset.pattern.permute.xlu0 0
        %480 = vperm.xlu0 %479, %v427
        %v481 = vpop.permute.xlu0 %480
        %482 = vset.pattern.permute.xlu0 0
        %483 = vperm.xlu0 %482, %v429
        %v484 = vpop.permute.xlu0 %483
        %485 = vset.pattern.permute.xlu0 0
        %486 = vperm.xlu0 %485, %v431
        %v487 = vpop.permute.xlu0 %486
        %488 = vset.pattern.permute.xlu0 0
        %489 = vperm.xlu0 %488, %v433
        %v490 = vpop.permute.xlu0 %489
        %491 = vset.pattern.permute.xlu0 0
        %492 = vperm.xlu0 %491, %v435
        %v493 = vpop.permute.xlu0 %492
        %494 = vset.pattern.permute.xlu0 0
        %495 = vperm.xlu0 %494, %v437
        %v496 = vpop.permute.xlu0 %495
        %497 = vset.pattern.permute.xlu0 0
        %498 = vperm.xlu0 %497, %v439
        %v499 = vpop.permute.xlu0 %498
        %500 = vset.pattern.permute.xlu0 0
        %501 = vperm.xlu0 %500, %v441
        %v502 = vpop.permute.xlu0 %501
        %503 = vset.pattern.permute.xlu0 0
        %504 = vperm.xlu0 %503, %v443
        %v505 = vpop.permute.xlu0 %504
        %506 = vset.pattern.permute.xlu0 0
        %507 = vperm.xlu0 %506, %v445
        %v508 = vpop.permute.xlu0 %507
        %509 = vset.pattern.permute.xlu0 0
        %510 = vperm.xlu0 %509, %v447
        %v511 = vpop.permute.xlu0 %510
        %v512 = vlaneseq
        %v513 = vshrl.u32 %v512, 7
        %v514 = vsub.s32 %v265, %v513
        %v515 = vrot.slane %v466, %v514
        %v516 = vlaneseq
        %v517 = vshrl.u32 %v516, 7
        %v518 = vsub.s32 %v270, %v517
        %v519 = vrot.slane %v469, %v518
        %v520 = vsel %vm275, %v519, %v515
        %v521 = vlaneseq
        %v522 = vshrl.u32 %v521, 7
        %v523 = vsub.s32 %v265, %v522
        %v524 = vrot.slane %v472, %v523
        %v525 = vlaneseq
        %v526 = vshrl.u32 %v525, 7
        %v527 = vsub.s32 %v270, %v526
        %v528 = vrot.slane %v475, %v527
        %v529 = vsel %vm275, %v528, %v524
        %v530 = vlaneseq
        %v531 = vshrl.u32 %v530, 7
        %v532 = vsub.s32 %v265, %v531
        %v533 = vrot.slane %v478, %v532
        %v534 = vlaneseq
        %v535 = vshrl.u32 %v534, 7
        %v536 = vsub.s32 %v270, %v535
        %v537 = vrot.slane %v481, %v536
        %v538 = vsel %vm275, %v537, %v533
        %v539 = vlaneseq
        %v540 = vshrl.u32 %v539, 7
        %v541 = vsub.s32 %v265, %v540
        %v542 = vrot.slane %v484, %v541
        %v543 = vlaneseq
        %v544 = vshrl.u32 %v543, 7
        %v545 = vsub.s32 %v270, %v544
        %v546 = vrot.slane %v487, %v545
        %v547 = vsel %vm275, %v546, %v542
        %v548 = vlaneseq
        %v549 = vshrl.u32 %v548, 7
        %v550 = vsub.s32 %v265, %v549
        %v551 = vrot.slane %v490, %v550
        %v552 = vlaneseq
        %v553 = vshrl.u32 %v552, 7
        %v554 = vsub.s32 %v270, %v553
        %v555 = vrot.slane %v493, %v554
        %v556 = vsel %vm275, %v555, %v551
        %v557 = vlaneseq
        %v558 = vshrl.u32 %v557, 7
        %v559 = vsub.s32 %v265, %v558
        %v560 = vrot.slane %v496, %v559
        %v561 = vlaneseq
        %v562 = vshrl.u32 %v561, 7
        %v563 = vsub.s32 %v270, %v562
        %v564 = vrot.slane %v499, %v563
        %v565 = vsel %vm275, %v564, %v560
        %v566 = vlaneseq
        %v567 = vshrl.u32 %v566, 7
        %v568 = vsub.s32 %v265, %v567
        %v569 = vrot.slane %v502, %v568
        %v570 = vlaneseq
        %v571 = vshrl.u32 %v570, 7
        %v572 = vsub.s32 %v270, %v571
        %v573 = vrot.slane %v505, %v572
        %v574 = vsel %vm275, %v573, %v569
        %v575 = vlaneseq
        %v576 = vshrl.u32 %v575, 7
        %v577 = vsub.s32 %v265, %v576
        %v578 = vrot.slane %v508, %v577
        %v579 = vlaneseq
        %v580 = vshrl.u32 %v579, 7
        %v581 = vsub.s32 %v270, %v580
        %v582 = vrot.slane %v511, %v581
        %v583 = vsel %vm275, %v582, %v578
        %v584 = vsel %vm340, %v529, %v520
        %v585 = vsel %vm342, %v538, %v584
        %v586 = vsel %vm344, %v547, %v585
        %v587 = vsel %vm346, %v556, %v586
        %v588 = vsel %vm348, %v565, %v587
        %v589 = vsel %vm350, %v574, %v588
        %v590 = vsel %vm352, %v583, %v589
        %v592 = vsel %vm355, %v590, 0.0
        %593 = vadd.xlane.f32.xlu0 %v592
        %v594 = vpop.xlane.xlu0 %593
        %v595 = vrcp.pop %v594
        %v597 = vlaneseq
        %v598 = vshrl.u32 %v597, 7
        %v599 = vsub.s32 0, %v598
        %v600 = vrot.slane %v595, %v599
        %v601 = vlaneseq
        %v602 = vshrl.u32 %v601, 7
        %v603 = vsub.s32 1, %v602
        %v604 = vrot.slane %v595, %v603
        %v605 = vlaneseq
        %v606 = vshrl.u32 %v605, 7
        %v607 = vsub.s32 2, %v606
        %v608 = vrot.slane %v595, %v607
        %v609 = vlaneseq
        %v610 = vshrl.u32 %v609, 7
        %v611 = vsub.s32 3, %v610
        %v612 = vrot.slane %v595, %v611
        %v613 = vlaneseq
        %v614 = vshrl.u32 %v613, 7
        %v615 = vsub.s32 4, %v614
        %v616 = vrot.slane %v595, %v615
        %v617 = vlaneseq
        %v618 = vshrl.u32 %v617, 7
        %v619 = vsub.s32 5, %v618
        %v620 = vrot.slane %v595, %v619
        %v621 = vlaneseq
        %v622 = vshrl.u32 %v621, 7
        %v623 = vsub.s32 6, %v622
        %v624 = vrot.slane %v595, %v623
        %v625 = vlaneseq
        %v626 = vshrl.u32 %v625, 7
        %v627 = vsub.s32 7, %v626
        %v628 = vrot.slane %v595, %v627
        %v637 = vmul.f32 %v417, %v600
        %v638 = vmul.f32 %v419, %v600
        %v639 = vmul.f32 %v421, %v604
        %v640 = vmul.f32 %v423, %v604
        %v641 = vmul.f32 %v425, %v608
        %v642 = vmul.f32 %v427, %v608
        %v643 = vmul.f32 %v429, %v612
        %v644 = vmul.f32 %v431, %v612
        %v645 = vmul.f32 %v433, %v616
        %v646 = vmul.f32 %v435, %v616
        %v647 = vmul.f32 %v437, %v620
        %v648 = vmul.f32 %v439, %v620
        %v649 = vmul.f32 %v441, %v624
        %v650 = vmul.f32 %v443, %v624
        %v651 = vmul.f32 %v445, %v628
        %v652 = vmul.f32 %v447, %v628
        %654 = vset.pattern.permute.xlu0 0
        %655 = vperm.xlu0 %654, %v637
        %v656 = vpop.permute.xlu0 %655
        %659 = vset.pattern.permute.xlu0 0
        %660 = vperm.xlu0 %659, %v638
        %v661 = vpop.permute.xlu0 %660
        %664 = vset.pattern.permute.xlu0 0
        %665 = vperm.xlu0 %664, %v639
        %v666 = vpop.permute.xlu0 %665
        %669 = vset.pattern.permute.xlu0 0
        %670 = vperm.xlu0 %669, %v640
        %v671 = vpop.permute.xlu0 %670
        %674 = vset.pattern.permute.xlu0 0
        %675 = vperm.xlu0 %674, %v641
        %v676 = vpop.permute.xlu0 %675
        %679 = vset.pattern.permute.xlu0 0
        %680 = vperm.xlu0 %679, %v642
        %v681 = vpop.permute.xlu0 %680
        %684 = vset.pattern.permute.xlu0 0
        %685 = vperm.xlu0 %684, %v643
        %v686 = vpop.permute.xlu0 %685
        %689 = vset.pattern.permute.xlu0 0
        %690 = vperm.xlu0 %689, %v644
        %v691 = vpop.permute.xlu0 %690
        %694 = vset.pattern.permute.xlu0 0
        %695 = vperm.xlu0 %694, %v645
        %v696 = vpop.permute.xlu0 %695
        %699 = vset.pattern.permute.xlu0 0
        %700 = vperm.xlu0 %699, %v646
        %v701 = vpop.permute.xlu0 %700
        %704 = vset.pattern.permute.xlu0 0
        %705 = vperm.xlu0 %704, %v647
        %v706 = vpop.permute.xlu0 %705
        %709 = vset.pattern.permute.xlu0 0
        %710 = vperm.xlu0 %709, %v648
        %v711 = vpop.permute.xlu0 %710
        %714 = vset.pattern.permute.xlu0 0
        %715 = vperm.xlu0 %714, %v649
        %v716 = vpop.permute.xlu0 %715
        %719 = vset.pattern.permute.xlu0 0
        %720 = vperm.xlu0 %719, %v650
        %v721 = vpop.permute.xlu0 %720
        %724 = vset.pattern.permute.xlu0 0
        %725 = vperm.xlu0 %724, %v651
        %v726 = vpop.permute.xlu0 %725
        %729 = vset.pattern.permute.xlu0 0
        %730 = vperm.xlu0 %729, %v652
        %v731 = vpop.permute.xlu0 %730
        %v733 = vmul.f32 %v177, %v656
        %v734 = vmul.f32 %v178, %v661
        %v735 = vmul.f32 %v179, %v666
        %v736 = vmul.f32 %v180, %v671
        %v737 = vmul.f32 %v181, %v676
        %v738 = vmul.f32 %v182, %v681
        %v739 = vmul.f32 %v183, %v686
        %v740 = vmul.f32 %v184, %v691
        %v741 = vmul.f32 %v185, %v696
        %v742 = vmul.f32 %v186, %v701
        %v743 = vmul.f32 %v187, %v706
        %v744 = vmul.f32 %v188, %v711
        %v745 = vmul.f32 %v189, %v716
        %v746 = vmul.f32 %v190, %v721
        %v747 = vmul.f32 %v191, %v726
        %v748 = vmul.f32 %v192, %v731
        %v749 = vadd.f32 %v733, %v734
        %v750 = vrot.slane %v749, 4
        %v751 = vadd.f32 %v749, %v750
        %v752 = vrot.slane %v751, 2
        %v753 = vadd.f32 %v751, %v752
        %v754 = vrot.slane %v753, 1
        %v755 = vadd.f32 %v753, %v754
        %v756 = vadd.f32 %v735, %v736
        %v757 = vrot.slane %v756, 4
        %v758 = vadd.f32 %v756, %v757
        %v759 = vrot.slane %v758, 2
        %v760 = vadd.f32 %v758, %v759
        %v761 = vrot.slane %v760, 1
        %v762 = vadd.f32 %v760, %v761
        %v763 = vadd.f32 %v737, %v738
        %v764 = vrot.slane %v763, 4
        %v765 = vadd.f32 %v763, %v764
        %v766 = vrot.slane %v765, 2
        %v767 = vadd.f32 %v765, %v766
        %v768 = vrot.slane %v767, 1
        %v769 = vadd.f32 %v767, %v768
        %v770 = vadd.f32 %v739, %v740
        %v771 = vrot.slane %v770, 4
        %v772 = vadd.f32 %v770, %v771
        %v773 = vrot.slane %v772, 2
        %v774 = vadd.f32 %v772, %v773
        %v775 = vrot.slane %v774, 1
        %v776 = vadd.f32 %v774, %v775
        %v777 = vadd.f32 %v741, %v742
        %v778 = vrot.slane %v777, 4
        %v779 = vadd.f32 %v777, %v778
        %v780 = vrot.slane %v779, 2
        %v781 = vadd.f32 %v779, %v780
        %v782 = vrot.slane %v781, 1
        %v783 = vadd.f32 %v781, %v782
        %v784 = vadd.f32 %v743, %v744
        %v785 = vrot.slane %v784, 4
        %v786 = vadd.f32 %v784, %v785
        %v787 = vrot.slane %v786, 2
        %v788 = vadd.f32 %v786, %v787
        %v789 = vrot.slane %v788, 1
        %v790 = vadd.f32 %v788, %v789
        %v791 = vadd.f32 %v745, %v746
        %v792 = vrot.slane %v791, 4
        %v793 = vadd.f32 %v791, %v792
        %v794 = vrot.slane %v793, 2
        %v795 = vadd.f32 %v793, %v794
        %v796 = vrot.slane %v795, 1
        %v797 = vadd.f32 %v795, %v796
        %v798 = vadd.f32 %v747, %v748
        %v799 = vrot.slane %v798, 4
        %v800 = vadd.f32 %v798, %v799
        %v801 = vrot.slane %v800, 2
        %v802 = vadd.f32 %v800, %v801
        %v803 = vrot.slane %v802, 1
        %v804 = vadd.f32 %v802, %v803
        %v813 = vsel %vm340, %v762, %v755
        %v814 = vsel %vm342, %v769, %v813
        %v815 = vsel %vm344, %v776, %v814
        %v816 = vsel %vm346, %v783, %v815
        %v817 = vsel %vm348, %v790, %v816
        %v818 = vsel %vm350, %v797, %v817
        %v819 = vsel %vm352, %v804, %v818
        %821 = vst [vmem:[%s170] sm:$0xff] %v819
        %s822 = sand.u32 %s74, 1
        %s823 = scalar_lea.sflag [#allocation4], %s822
        %s824 = sand.u32 %s74, 1
        %s825 = smul.addr %s824, 8
        %s826 = scalar_lea.vmem [#allocation5], %s825
        // Predicated region
        $region33: #{tpu_custom_call.1} parent=27 // pred_check
          %p827 = pneg %p84
        $region34: #{tpu_custom_call.1} parent=27 // pred_check_branch
          %829 = sbr.rel (%p827) target = $region36
        $region35: #{tpu_custom_call.1} parent=27 // pred_region
          %s831 = ssub.s32 128, 128
          %832 = vsyncadd %s823, %s831
          %s833 = smul.addr %s19, 128
          %s834 = scalar_lea.hbm %s2, %s833
          %s836 = sshll.u32 %s826, 4
          %s837 = int_to_ptr.vmem [resolvable:$true] %s836
          %839 = dma.vmem_to_hbm [thread:$0]  %s837, 128, %s834, %s823
        $region36: #{tpu_custom_call.1} parent=27 // pred_fallthru
          _
      $region28: #{tpu_custom_call.1} parent=5 // pred_fallthru
        _
      %p840 = scmp.le.s32.totalorder 2, %s14
      // Predicated region
      $region37: #{tpu_custom_call.1} parent=5 // pred_check
        %p841 = pneg %p840
      $region38: #{tpu_custom_call.1} parent=5 // pred_check_branch
        %843 = sbr.rel (%p841) target = $region40
      $region39: #{tpu_custom_call.1} parent=5 // pred_region
        %s844 = ssub.s32 %s14, 2
        // Predicated region
        $region41: #{tpu_custom_call.1} parent=39 // pred_check
          %p845 = pneg %p90
        $region42: #{tpu_custom_call.1} parent=39 // pred_check_branch
          %847 = sbr.rel (%p845) target = $region44
        $region43: #{tpu_custom_call.1} parent=39 // pred_region
          %s848 = sand.u32 %s75, 1
          %s849 = scalar_lea.sflag [#allocation4], %s848
          %s850 = sand.u32 %s75, 1
          %s851 = smul.addr %s850, 8
          %s852 = scalar_lea.vmem [#allocation5], %s851
          %853 = dma.done %s849, 128
        $region44: #{tpu_custom_call.1} parent=39 // pred_fallthru
          _
      $region40: #{tpu_custom_call.1} parent=5 // pred_fallthru
        _
    $region6: #{tpu_custom_call.1} parent=1 // loop_footer
      %s18 = sadd.s32 1, %s14
    $region7: #{tpu_custom_call.1} parent=1 // loop_footer_branch
      %13 = sbr.rel target = $region3
    $region8: #{tpu_custom_call.1} parent=1 // loop_exit
      _
    %854 = vsyncpa [#allocation3], 1
    %s855 = scalar_lea.sflag [#allocation3], 1
    %856 = vsyncpa %s855, 1
    %857 = vsyncpa [#allocation4], 1
    %s858 = scalar_lea.sflag [#allocation4], 1
    %859 = vsyncpa %s858, 1

</llo_original>
